<compile_context>
chip_gen: v6e
topology: v6e:2x2x1
jax: 0.10.0
libtpu: 0.0.40
codegen_flags: <defaults>
</compile_context>

<pallas_src>
import functools
from typing import NamedTuple

import jax
import jax.numpy as jnp
from jax import lax
from jax.experimental import pallas as pl
from jax.experimental.pallas import tpu as pltpu


def _round_up(n, m):
    return ((n + m - 1) // m) * m


def _pad_dim(d):
    # Lane-dense padding: 128 for small dims, 256 (v6e/v7x MXU width) once the overhead is small.
    return _round_up(d, 256 if d >= 512 else 128)


# ---------------------------------------------------------------------------
# One-time hardware / feature queries (cached at module level).
# ---------------------------------------------------------------------------
_HW_CACHE = None


def _hw_params():
    """Returns (vmem_capacity_bytes, default_block_m, has_two_tensorcores)."""
    global _HW_CACHE
    if _HW_CACHE is not None:
        return _HW_CACHE
    vmem_cap, block_m, two_cores = 128 << 20, 256, False
    try:
        kind = jax.devices()[0].device_kind.lower()
    except Exception:  # hardware query only; defaults are safe.
        kind = ""
    if "v5" in kind:
        block_m = 128  # v5e MXU is 128 wide; M=128 already saturates it.
    if "v7" in kind:
        vmem_cap, two_cores = 64 << 20, True
    try:
        vmem_cap = int(pltpu.get_tpu_info().vmem_capacity_bytes)
    except Exception:  # best-effort query; device_kind fallback above.
        pass
    _HW_CACHE = (vmem_cap, block_m, two_cores)
    return _HW_CACHE


_SINGLE_BUFFER_OK = None


def _single_buffer_supported():
    """One-time probe: does this jax build accept pl.Buffered(1) on in/out BlockSpecs?"""
    global _SINGLE_BUFFER_OK
    if _SINGLE_BUFFER_OK is not None:
        return _SINGLE_BUFFER_OK

    def _probe(x_ref, o_ref):
        o_ref[...] = x_ref[...] * 2.0

    x = jnp.arange(8 * 128, dtype=jnp.float32).reshape(8, 128)
    try:
        out = pl.pallas_call(
            _probe,
            out_shape=jax.ShapeDtypeStruct((8, 128), jnp.float32),
            grid_spec=pltpu.PrefetchScalarGridSpec(
                num_scalar_prefetch=0,
                grid=(1,),
                in_specs=[pl.BlockSpec((8, 128), lambda i: (0, 0),
                                       pipeline_mode=pl.Buffered(1))],
                out_specs=pl.BlockSpec((8, 128), lambda i: (0, 0),
                                       pipeline_mode=pl.Buffered(1))),
        )(x)
        _SINGLE_BUFFER_OK = bool(jnp.all(jax.block_until_ready(out) == x * 2.0))
    except Exception:  # probe only; real kernel errors are never swallowed by this.
        _SINGLE_BUFFER_OK = False
    return _SINGLE_BUFFER_OK


# ---------------------------------------------------------------------------
# Parameter preparation (hoisted out of the per-call forward path).
# ---------------------------------------------------------------------------
class MLPParams(NamedTuple):
    w1: jax.Array      # (in_pad, h_pad) bf16, zero-padded
    gamma: jax.Array   # (1, h_pad) f32, zero-padded
    beta: jax.Array    # (1, h_pad) f32, zero-padded
    w2: jax.Array      # (h_pad, out_pad) bf16, zero-padded
    b2: jax.Array      # (1, out_pad) f32, zero-padded
    in_dim: int
    hidden_dim: int
    out_dim: int
    streamed: bool
    block_k: int


def prepare_mlp_params(w1_t, gamma, beta, w2_t, b2, *, force_streamed=None, block_k=512):
    """Pads and casts MLP parameters once.

    w1_t: (IN, H)  -- PyTorch Linear weight (H, IN) pre-transposed.
    w2_t: (H, OUT) -- PyTorch Linear weight (OUT, H) pre-transposed.
    """
    IN, H = w1_t.shape
    H2, OUT = w2_t.shape
    assert H == H2 and gamma.shape == (H,) and beta.shape == (H,) and b2.shape == (OUT,)

    vmem_cap, _, _ = _hw_params()
    h_pad, out_pad = _pad_dim(H), _pad_dim(OUT)

    # The resident path keeps W1 and W2 whole in VMEM; gate it on the actual VMEM capacity
    # (v7x only has 64 MiB per TensorCore).
    resident_bytes = (_pad_dim(IN) * h_pad + h_pad * out_pad) * 2  # bf16
    if force_streamed is None:
        streamed = resident_bytes > vmem_cap // 3
    else:
        streamed = bool(force_streamed)

    if streamed:
        bk = min(int(block_k), _pad_dim(IN))
        in_pad = _round_up(IN, bk)
    else:
        bk = 0
        in_pad = _pad_dim(IN)

    # Zero padding is numerically inert: padded W1 columns / gamma / beta / W2 rows are zero,
    # so padded hidden columns are exactly 0 through LN -> LeakyReLU -> second matmul.
    w1_p = jnp.zeros((in_pad, h_pad), jnp.bfloat16).at[:IN, :H].set(w1_t.astype(jnp.bfloat16))
    w2_p = jnp.zeros((h_pad, out_pad), jnp.bfloat16).at[:H, :OUT].set(w2_t.astype(jnp.bfloat16))
    gamma_p = jnp.zeros((1, h_pad), jnp.float32).at[0, :H].set(gamma.astype(jnp.float32))
    beta_p = jnp.zeros((1, h_pad), jnp.float32).at[0, :H].set(beta.astype(jnp.float32))
    b2_p = jnp.zeros((1, out_pad), jnp.float32).at[0, :OUT].set(b2.astype(jnp.float32))

    return MLPParams(w1_p, gamma_p, beta_p, w2_p, b2_p, IN, H, OUT, streamed, bk)


# ---------------------------------------------------------------------------
# Kernels.
# ---------------------------------------------------------------------------
def _ln_leaky_out(h, gamma, beta, w2, b2, o_ref, inv_h):
    """Fused single-pass LayerNorm -> affine -> LeakyReLU -> second matmul -> store."""
    s1 = jnp.sum(h, axis=-1, keepdims=True)
    s2 = jnp.sum(h * h, axis=-1, keepdims=True)
    mean = s1 * inv_h
    var = jnp.maximum(s2 * inv_h - mean * mean, 0.0)   # clamp: f32 cancellation safety
    hn = (h - mean) * lax.rsqrt(var + 1e-5)
    hn = hn * gamma + beta
    hn = jnp.where(hn >= 0, hn, 0.01 * hn)             # LeakyReLU (slope 0.01)
    # Dropout(0.1) -> identity in eval mode.
    out = jnp.dot(hn.astype(jnp.bfloat16), w2, preferred_element_type=jnp.float32) + b2
    o_ref[...] = out.astype(o_ref.dtype)


def _mlp_resident_kernel(x_ref, w1_ref, gamma_ref, beta_ref, w2_ref, b2_ref, o_ref, *, inv_h):
    h = jnp.dot(x_ref[...], w1_ref[...], preferred_element_type=jnp.float32)
    _ln_leaky_out(h, gamma_ref[...], beta_ref[...], w2_ref[...], b2_ref[...], o_ref, inv_h)


def _mlp_streamed_kernel(x_ref, w1_ref, gamma_ref, beta_ref, w2_ref, b2_ref, o_ref, h_acc,
                         *, inv_h):
    k = pl.program_id(1)

    @pl.when(k == 0)
    def _():
        h_acc[...] = jnp.zeros_like(h_acc)

    h_acc[...] += jnp.dot(x_ref[...], w1_ref[...], preferred_element_type=jnp.float32)

    @pl.when(k == pl.num_programs(1) - 1)
    def _():
        _ln_leaky_out(h_acc[...], gamma_ref[...], beta_ref[...], w2_ref[...], b2_ref[...],
                      o_ref, inv_h)


# ---------------------------------------------------------------------------
# Forward wrapper.
# ---------------------------------------------------------------------------
def mlp_forward(x, params: MLPParams, *, block_m=None):
    B, IN = x.shape
    assert IN == params.in_dim
    vmem_cap, default_bm, two_cores = _hw_params()
    if block_m is None:
        block_m = default_bm

    in_pad, h_pad = params.w1.shape
    out_pad = params.w2.shape[1]
    out_dtype = x.dtype
    out_bytes = jnp.dtype(out_dtype).itemsize

    # Batch tile: multiple of 16 (bf16 sublane pack).  On v7x split a single-tile batch into
    # >= 2 tiles (when the batch is big enough) so "parallel" can shard over both TensorCores.
    b_full = _round_up(B, 16)
    bm = min(block_m, b_full)
    if two_cores and b_full <= block_m and b_full >= 32:
        bm = _round_up(-(-B // 2), 16)
    b_pad = _round_up(B, bm)
    nb = b_pad // bm

    sb = _single_buffer_supported()

    def inv_spec(shape):
        if sb:
            return pl.BlockSpec(shape, lambda *_: (0, 0), pipeline_mode=pl.Buffered(1))
        return pl.BlockSpec(shape, lambda *_: (0, 0))

    def io_spec(shape, index_map, single):
        if single and sb:
            return pl.BlockSpec(shape, index_map, pipeline_mode=pl.Buffered(1))
        return pl.BlockSpec(shape, index_map)

    # Per-call activation padding only (weights were padded once in prepare_mlp_params).
    x_b = x.astype(jnp.bfloat16)
    if (b_pad, in_pad) != (B, IN):
        x_p = jnp.zeros((b_pad, in_pad), jnp.bfloat16).at[:B, :IN].set(x_b)
    else:
        x_p = x_b

    inv_h = 1.0 / float(params.hidden_dim)
    w_bufs = 1 if sb else 2
    param_bytes = (2 * h_pad + out_pad) * 4

    if not params.streamed:
        kernel = functools.partial(_mlp_resident_kernel, inv_h=inv_h)
        single = nb == 1
        act_bufs = 1 if (single and sb) else 2
        est = (act_bufs * bm * in_pad * 2                                   # x tile (bf16)
               + act_bufs * bm * out_pad * out_bytes                        # out tile
               + w_bufs * ((in_pad * h_pad + h_pad * out_pad) * 2 + param_bytes)
               + 3 * bm * h_pad * 4                                         # f32 h intermediates
               + bm * out_pad * 4)                                          # f32 pre-store result
        vmem_limit = min(max(int(est * 1.5) + (4 << 20), 32 << 20), (vmem_cap * 3) // 4)

        out_p = pl.pallas_call(
            kernel,
            out_shape=jax.ShapeDtypeStruct((b_pad, out_pad), out_dtype),
            grid_spec=pltpu.PrefetchScalarGridSpec(
                num_scalar_prefetch=0,
                grid=(nb,),
                in_specs=[io_spec((bm, in_pad), lambda i: (i, 0), single),
                          inv_spec((in_pad, h_pad)),
                          inv_spec((1, h_pad)),
                          inv_spec((1, h_pad)),
                          inv_spec((h_pad, out_pad)),
                          inv_spec((1, out_pad))],
                out_specs=io_spec((bm, out_pad), lambda i: (i, 0), single)),
            compiler_params=pltpu.CompilerParams(
                dimension_semantics=("parallel",),
                vmem_limit_bytes=vmem_limit),
        )(x_p, params.w1, params.gamma, params.beta, params.w2, params.b2)
    else:
        bk = params.block_k
        nk = in_pad // bk
        kernel = functools.partial(_mlp_streamed_kernel, inv_h=inv_h)
        single = (nb * nk) == 1
        act_bufs = 1 if (single and sb) else 2
        est = (2 * bm * bk * 2                                              # x K-tiles (bf16)
               + 2 * bk * h_pad * 2                                         # W1 K-tiles (bf16)
               + act_bufs * bm * out_pad * out_bytes                        # out tile
               + w_bufs * (h_pad * out_pad * 2 + param_bytes)               # W2 + LN/bias params
               + bm * h_pad * 4                                             # f32 accumulator
               + 3 * bm * h_pad * 4                                         # f32 LN intermediates
               + bm * out_pad * 4)                                          # f32 pre-store result
        vmem_limit = min(max(int(est * 1.5) + (4 << 20), 32 << 20), (vmem_cap * 3) // 4)

        out_p = pl.pallas_call(
            kernel,
            out_shape=jax.ShapeDtypeStruct((b_pad, out_pad), out_dtype),
            grid_spec=pltpu.PrefetchScalarGridSpec(
                num_scalar_prefetch=0,
                grid=(nb, nk),
                in_specs=[pl.BlockSpec((bm, bk), lambda i, k: (i, k)),      # x K-tile
                          pl.BlockSpec((bk, h_pad), lambda i, k: (k, 0)),   # W1 K-tile
                          inv_spec((1, h_pad)),
                          inv_spec((1, h_pad)),
                          inv_spec((h_pad, out_pad)),
                          inv_spec((1, out_pad))],
                out_specs=pl.BlockSpec((bm, out_pad), lambda i, k: (i, 0)),
                scratch_shapes=[pltpu.VMEM((bm, h_pad), jnp.float32)]),
            compiler_params=pltpu.CompilerParams(
                dimension_semantics=("parallel", "arbitrary"),
                vmem_limit_bytes=vmem_limit),
        )(x_p, params.w1, params.gamma, params.beta, params.w2, params.b2)

    return out_p[:B, :params.out_dim]


def mlp_reference(x, w1_t, gamma, beta, w2_t, b2):
    # Same numerics as the kernel: bf16 matmul operands, f32 accumulation, f32 LayerNorm.
    h = jnp.dot(x.astype(jnp.bfloat16), w1_t.astype(jnp.bfloat16),
                preferred_element_type=jnp.float32)
    mean = h.mean(-1, keepdims=True)
    var = ((h - mean) ** 2).mean(-1, keepdims=True)
    hn = (h - mean) / jnp.sqrt(var + 1e-5) * gamma + beta
    hn = jnp.where(hn >= 0, hn, 0.01 * hn)
    return jnp.dot(hn.astype(jnp.bfloat16), w2_t.astype(jnp.bfloat16),
                   preferred_element_type=jnp.float32) + b2


if __name__ == "__main__":
    key = jax.random.PRNGKey(0)

    def make_case(k, B, IN, H, OUT):
        kx, k1, k2, k3, kg, kb = jax.random.split(k, 6)
        x = jax.random.normal(kx, (B, IN), dtype=jnp.float32)
        # PyTorch Linear weight is (out, in); pass pre-transposed (in, out).
        w1_t = jax.random.normal(k1, (IN, H), dtype=jnp.float32) / jnp.sqrt(IN)
        w2_t = jax.random.normal(k2, (H, OUT), dtype=jnp.float32) / jnp.sqrt(H)
        b2 = jax.random.normal(k3, (OUT,), dtype=jnp.float32) * 0.1
        gamma = 1.0 + 0.1 * jax.random.normal(kg, (H,), dtype=jnp.float32)
        beta = 0.1 * jax.random.normal(kb, (H,), dtype=jnp.float32)
        return x, w1_t, gamma, beta, w2_t, b2

    ka, kb_ = jax.random.split(key)

    # Case 1: small MLP (batch=16, in=32, hidden=64, out=16) -> resident-weight path.
    x, w1_t, gamma, beta, w2_t, b2 = make_case(ka, 16, 32, 64, 16)
    params = prepare_mlp_params(w1_t, gamma, beta, w2_t, b2, force_streamed=False)
    out = jax.block_until_ready(mlp_forward(x, params))
    ref = mlp_reference(x, w1_t, gamma, beta, w2_t, b2)
    assert out.shape == (16, 16) and out.dtype == x.dtype
    assert jnp.allclose(out, ref, atol=2e-3, rtol=2e-3), float(jnp.max(jnp.abs(out - ref)))

    # Case 2: exercise the streamed (K-reduction) path used when weights exceed the VMEM budget
    # (batch=24, in=256 split into two K-tiles, hidden=128, out=64; two batch tiles).
    x, w1_t, gamma, beta, w2_t, b2 = make_case(kb_, 24, 256, 128, 64)
    params = prepare_mlp_params(w1_t, gamma, beta, w2_t, b2, force_streamed=True, block_k=128)
    out = jax.block_until_ready(mlp_forward(x, params, block_m=16))
    ref = mlp_reference(x, w1_t, gamma, beta, w2_t, b2)
    assert out.shape == (24, 64)
    assert jnp.allclose(out, ref, atol=2e-3, rtol=2e-3), float(jnp.max(jnp.abs(out - ref)))

    print("KERNEL_OK")
</pallas_src>

<mosaic_0001>
module attributes {stable_mosaic.version = 11 : i64} {
  func.func @_probe(%arg0: i32, %arg1: memref<8x128xf32, #tpu.memory_space<vmem>>, %arg2: memref<8x128xf32, #tpu.memory_space<vmem>>) attributes {dimension_semantics = [#tpu.dimension_semantics<arbitrary>], iteration_bounds = array<i64: 1>, scalar_prefetch = 0 : i64, scratch_operands = 0 : i64, tpu.core_type = #tpu.core_type<tc>, window_params = [{pipeline_mode = #tpu.pipeline_mode<synchronous>, transform_indices = @transform_0, window_bounds = array<i64: 8, 128>}, {pipeline_mode = #tpu.pipeline_mode<synchronous>, transform_indices = @transform_1, window_bounds = array<i64: 8, 128>}]} {
    %c0 = arith.constant 0 : index
    %c0_0 = arith.constant 0 : index
    %0 = vector.load %arg1[%c0, %c0_0] : memref<8x128xf32, #tpu.memory_space<vmem>>, vector<8x128xf32>
    %cst = arith.constant 2.000000e+00 : f32
    %1 = vector.broadcast %cst : f32 to vector<8x128xf32>
    %2 = arith.mulf %0, %1 : vector<8x128xf32>
    %c0_1 = arith.constant 0 : index
    %c0_2 = arith.constant 0 : index
    %3 = vector.load %arg2[%c0_1, %c0_2] : memref<8x128xf32, #tpu.memory_space<vmem>>, vector<8x128xf32>
    tpu.vector_store %arg2[%c0_1, %c0_2], %2 {strides = array<i32>} : memref<8x128xf32, #tpu.memory_space<vmem>>, vector<8x128xf32>,
    return
  }
  func.func @transform_0(%arg0: i32) -> (i32, i32) {
    %c0_i32 = arith.constant 0 : i32
    %c0_i32_0 = arith.constant 0 : i32
    %c0_i32_1 = arith.constant 0 : i32
    return %c0_i32, %c0_i32_0 : i32, i32
  }
  func.func @transform_1(%arg0: i32) -> (i32, i32) {
    %c0_i32 = arith.constant 0 : i32
    %c0_i32_0 = arith.constant 0 : i32
    %c0_i32_1 = arith.constant 0 : i32
    return %c0_i32, %c0_i32_0 : i32, i32
  }
}

module attributes {stable_mosaic.version = 11 : i64} {
  func.func @_mlp_resident_kernel(%arg0: i32, %arg1: memref<16x128xbf16, #tpu.memory_space<vmem>>, %arg2: memref<128x128xbf16, #tpu.memory_space<vmem>>, %arg3: memref<1x128xf32, #tpu.memory_space<vmem>>, %arg4: memref<1x128xf32, #tpu.memory_space<vmem>>, %arg5: memref<128x128xbf16, #tpu.memory_space<vmem>>, %arg6: memref<1x128xf32, #tpu.memory_space<vmem>>, %arg7: memref<16x128xf32, #tpu.memory_space<vmem>>) attributes {dimension_semantics = [#tpu.dimension_semantics<parallel>], iteration_bounds = array<i64: 1>, scalar_prefetch = 0 : i64, scratch_operands = 0 : i64, tpu.core_type = #tpu.core_type<tc>, window_params = [{transform_indices = @transform_0, window_bounds = array<i64: 16, 128>}, {pipeline_mode = #tpu.pipeline_mode<synchronous>, transform_indices = @transform_1, window_bounds = array<i64: 128, 128>}, {pipeline_mode = #tpu.pipeline_mode<synchronous>, transform_indices = @transform_2, window_bounds = array<i64: 1, 128>}, {pipeline_mode = #tpu.pipeline_mode<synchronous>, transform_indices = @transform_3, window_bounds = array<i64: 1, 128>}, {pipeline_mode = #tpu.pipeline_mode<synchronous>, transform_indices = @transform_4, window_bounds = array<i64: 128, 128>}, {pipeline_mode = #tpu.pipeline_mode<synchronous>, transform_indices = @transform_5, window_bounds = array<i64: 1, 128>}, {transform_indices = @transform_6, window_bounds = array<i64: 16, 128>}]} {
    %c0 = arith.constant 0 : index
    %c0_0 = arith.constant 0 : index
    %0 = vector.load %arg1[%c0, %c0_0] : memref<16x128xbf16, #tpu.memory_space<vmem>>, vector<16x128xbf16>
    %c0_1 = arith.constant 0 : index
    %c0_2 = arith.constant 0 : index
    %1 = vector.load %arg2[%c0_1, %c0_2] : memref<128x128xbf16, #tpu.memory_space<vmem>>, vector<128x128xbf16>
    %cst = arith.constant dense<0.000000e+00> : vector<16x128xf32>
    %2 = tpu.matmul %0, %1, %cst {dimension_numbers = #tpu.dot_dimension_numbers<[1], [0], [0], [1], [0, 0, 1, 1], [], []>} : vector<16x128xbf16>, vector<128x128xbf16>, vector<16x128xf32> -> vector<16x128xf32>
    %c0_3 = arith.constant 0 : index
    %c0_4 = arith.constant 0 : index
    %3 = vector.load %arg3[%c0_3, %c0_4] : memref<1x128xf32, #tpu.memory_space<vmem>>, vector<1x128xf32>
    %c0_5 = arith.constant 0 : index
    %c0_6 = arith.constant 0 : index
    %4 = vector.load %arg4[%c0_5, %c0_6] : memref<1x128xf32, #tpu.memory_space<vmem>>, vector<1x128xf32>
    %c0_7 = arith.constant 0 : index
    %c0_8 = arith.constant 0 : index
    %5 = vector.load %arg5[%c0_7, %c0_8] : memref<128x128xbf16, #tpu.memory_space<vmem>>, vector<128x128xbf16>
    %c0_9 = arith.constant 0 : index
    %c0_10 = arith.constant 0 : index
    %6 = vector.load %arg6[%c0_9, %c0_10] : memref<1x128xf32, #tpu.memory_space<vmem>>, vector<1x128xf32>
    %cst_11 = arith.constant dense<0.000000e+00> : vector<16xf32>
    %7 = vector.multi_reduction <add>, %2, %cst_11 [1] : vector<16x128xf32> to vector<16xf32>
    %8 = vector.shape_cast %7 : vector<16xf32> to vector<16x1xf32>
    %9 = arith.mulf %2, %2 : vector<16x128xf32>
    %cst_12 = arith.constant dense<0.000000e+00> : vector<16xf32>
    %10 = vector.multi_reduction <add>, %9, %cst_12 [1] : vector<16x128xf32> to vector<16xf32>
    %11 = vector.shape_cast %10 : vector<16xf32> to vector<16x1xf32>
    %cst_13 = arith.constant 1.562500e-02 : f32
    %12 = vector.broadcast %cst_13 : f32 to vector<16x1xf32>
    %13 = arith.mulf %8, %12 : vector<16x1xf32>
    %cst_14 = arith.constant 1.562500e-02 : f32
    %14 = vector.broadcast %cst_14 : f32 to vector<16x1xf32>
    %15 = arith.mulf %11, %14 : vector<16x1xf32>
    %16 = arith.mulf %13, %13 : vector<16x1xf32>
    %17 = arith.subf %15, %16 : vector<16x1xf32>
    %cst_15 = arith.constant 0.000000e+00 : f32
    %18 = vector.broadcast %cst_15 : f32 to vector<16x1xf32>
    %19 = arith.maximumf %17, %18 : vector<16x1xf32>
    %20 = vector.broadcast %13 : vector<16x1xf32> to vector<16x128xf32>
    %21 = arith.subf %2, %20 : vector<16x128xf32>
    %cst_16 = arith.constant 9.99999974E-6 : f32
    %22 = vector.broadcast %cst_16 : f32 to vector<16x1xf32>
    %23 = arith.addf %19, %22 : vector<16x1xf32>
    %24 = math.rsqrt %23 : vector<16x1xf32>
    %25 = vector.broadcast %24 : vector<16x1xf32> to vector<16x128xf32>
    %26 = arith.mulf %21, %25 : vector<16x128xf32>
    %27 = vector.broadcast %3 : vector<1x128xf32> to vector<16x128xf32>
    %28 = arith.mulf %26, %27 : vector<16x128xf32>
    %29 = vector.broadcast %4 : vector<1x128xf32> to vector<16x128xf32>
    %30 = arith.addf %28, %29 : vector<16x128xf32>
    %cst_17 = arith.constant 0.000000e+00 : f32
    %31 = vector.broadcast %cst_17 : f32 to vector<16x128xf32>
    %32 = arith.cmpf oge, %30, %31 : vector<16x128xf32>
    %cst_18 = arith.constant 0.00999999977 : f32
    %33 = vector.broadcast %cst_18 : f32 to vector<16x128xf32>
    %34 = arith.mulf %33, %30 : vector<16x128xf32>
    %35 = arith.select %32, %30, %34 : vector<16x128xi1>, vector<16x128xf32>
    %36 = arith.truncf %35 : vector<16x128xf32> to vector<16x128xbf16>
    %cst_19 = arith.constant dense<0.000000e+00> : vector<16x128xf32>
    %37 = tpu.matmul %36, %5, %cst_19 {dimension_numbers = #tpu.dot_dimension_numbers<[1], [0], [0], [1], [0, 0, 1, 1], [], []>} : vector<16x128xbf16>, vector<128x128xbf16>, vector<16x128xf32> -> vector<16x128xf32>
    %38 = vector.broadcast %6 : vector<1x128xf32> to vector<16x128xf32>
    %39 = arith.addf %37, %38 : vector<16x128xf32>
    %c0_20 = arith.constant 0 : index
    %c0_21 = arith.constant 0 : index
    %40 = vector.load %arg7[%c0_20, %c0_21] : memref<16x128xf32, #tpu.memory_space<vmem>>, vector<16x128xf32>
    tpu.vector_store %arg7[%c0_20, %c0_21], %39 {strides = array<i32>} : memref<16x128xf32, #tpu.memory_space<vmem>>, vector<16x128xf32>,
    return
  }
  func.func @transform_0(%arg0: i32) -> (i32, i32) {
    %c0_i32 = arith.constant 0 : i32
    %c0_i32_0 = arith.constant 0 : i32
    return %arg0, %c0_i32 : i32, i32
  }
  func.func @transform_1(%arg0: i32) -> (i32, i32) {
    %c0_i32 = arith.constant 0 : i32
    %c0_i32_0 = arith.constant 0 : i32
    %c0_i32_1 = arith.constant 0 : i32
    return %c0_i32, %c0_i32_0 : i32, i32
  }
  func.func @transform_2(%arg0: i32) -> (i32, i32) {
    %c0_i32 = arith.constant 0 : i32
    %c0_i32_0 = arith.constant 0 : i32
    %c0_i32_1 = arith.constant 0 : i32
    return %c0_i32, %c0_i32_0 : i32, i32
  }
  func.func @transform_3(%arg0: i32) -> (i32, i32) {
    %c0_i32 = arith.constant 0 : i32
    %c0_i32_0 = arith.constant 0 : i32
    %c0_i32_1 = arith.constant 0 : i32
    return %c0_i32, %c0_i32_0 : i32, i32
  }
  func.func @transform_4(%arg0: i32) -> (i32, i32) {
    %c0_i32 = arith.constant 0 : i32
    %c0_i32_0 = arith.constant 0 : i32
    %c0_i32_1 = arith.constant 0 : i32
    return %c0_i32, %c0_i32_0 : i32, i32
  }
  func.func @transform_5(%arg0: i32) -> (i32, i32) {
    %c0_i32 = arith.constant 0 : i32
    %c0_i32_0 = arith.constant 0 : i32
    %c0_i32_1 = arith.constant 0 : i32
    return %c0_i32, %c0_i32_0 : i32, i32
  }
  func.func @transform_6(%arg0: i32) -> (i32, i32) {
    %c0_i32 = arith.constant 0 : i32
    %c0_i32_0 = arith.constant 0 : i32
    return %arg0, %c0_i32 : i32, i32
  }
}

</mosaic_0001>

<llo_original>
// kernel: tpu_custom_call.1
$region0: #{tpu_custom_call.1}
  #allocation0 [shape = 'u32[]', space=smem, size = 0x4, offset = 0x4, fixed_abs, tag = 'smem constant byte address 0x4 - core index']
  #allocation1 [shape = 'u32[144,128]{1,0:T(1,128)}', space=vmem, size = 0x12000, scoped, tag = 'internal scratch']
  %s0 = inlined_call_operand.hbm [shape: f32[8,128], index: 0, kind: input, shape index: {}]
  %s1 = inlined_call_operand.hbm [shape: f32[8,128], index: 1, kind: output, shape index: {}]
  %s2 = sld [smem:[#allocation0]]
  $region18: #{tpu_custom_call.1} parent=0
    _
  %s4 = ssub.s32 1, %s2
  %s5 = scalar_select 0, %s4, %s2
  $region1: #{tpu_custom_call.1} parent=0
    #allocation2 [shape = 'u8[4096]{0}', space=vmem, size = 0x1000, scoped, tag = 'input window, operand 0, single buffered']
    #allocation3 [shape = 's32[1]{0}', space=sflag, size = 0x4, scoped, tag = 'scoped memory for tpu_custom_call.1']
    #allocation4 [shape = 's32[1]{0}', space=sflag, size = 0x4, scoped, tag = 'scoped memory for tpu_custom_call.1']
    #allocation5 [shape = 'u8[4096]{0}', space=vmem, size = 0x1000, scoped, tag = 'output window, operand 0, single buffered']
    %6 = vsyncpa [#allocation3], 0
    %7 = vsyncpa [#allocation4], 0
    // Predicated region
    $region2: #{tpu_custom_call.1} parent=1 // pred_check
      _
    $region3: #{tpu_custom_call.1} parent=1 // pred_check_branch
      %9 = sbr.rel (0) target = $region5
    $region4: #{tpu_custom_call.1} parent=1 // pred_region
      %s11 = ssub.s32 128, 128
      %12 = vsyncadd [#allocation3], %s11
      %s14 = sshll.u32 [#allocation2], 4
      %s15 = int_to_ptr.vmem [resolvable:$true] %s14
      %17 = dma.hbm_to_vmem [thread:$0]  %s0, 128, %s15, [#allocation3]
    $region5: #{tpu_custom_call.1} parent=1 // pred_fallthru
      _
    // Predicated region
    $region6: #{tpu_custom_call.1} parent=1 // pred_check
      _
    $region7: #{tpu_custom_call.1} parent=1 // pred_check_branch
      %19 = sbr.rel (0) target = $region9
    $region8: #{tpu_custom_call.1} parent=1 // pred_region
      %20 = dma.done [#allocation3], 128
    $region9: #{tpu_custom_call.1} parent=1 // pred_fallthru
      _
    %v21 = vld [vmem:[#allocation2] sm:$0xff]
    %v22 = vmul.f32 %v21, 2.0
    %23 = vst [vmem:[#allocation5] sm:$0xff] %v22
    // Predicated region
    $region10: #{tpu_custom_call.1} parent=1 // pred_check
      _
    $region11: #{tpu_custom_call.1} parent=1 // pred_check_branch
      %25 = sbr.rel (0) target = $region13
    $region12: #{tpu_custom_call.1} parent=1 // pred_region
      %s27 = ssub.s32 128, 128
      %28 = vsyncadd [#allocation4], %s27
      %s30 = sshll.u32 [#allocation5], 4
      %s31 = int_to_ptr.vmem [resolvable:$true] %s30
      %33 = dma.vmem_to_hbm [thread:$0]  %s31, 128, %s1, [#allocation4]
    $region13: #{tpu_custom_call.1} parent=1 // pred_fallthru
      _
    // Predicated region
    $region14: #{tpu_custom_call.1} parent=1 // pred_check
      _
    $region15: #{tpu_custom_call.1} parent=1 // pred_check_branch
      %35 = sbr.rel (0) target = $region17
    $region16: #{tpu_custom_call.1} parent=1 // pred_region
      %36 = dma.done [#allocation4], 128
    $region17: #{tpu_custom_call.1} parent=1 // pred_fallthru
      _
    %37 = vsyncpa [#allocation3], 1
    %38 = vsyncpa [#allocation4], 1

// kernel: tpu_custom_call.1
$region0: #{tpu_custom_call.1}
  #allocation0 [shape = 'u32[]', space=smem, size = 0x4, offset = 0x4, fixed_abs, tag = 'smem constant byte address 0x4 - core index']
  #allocation1 [shape = 'u32[144,128]{1,0:T(1,128)}', space=vmem, size = 0x12000, scoped, tag = 'internal scratch']
  %s0 = inlined_call_operand.hbm [shape: bf16[16,128], index: 0, kind: input, shape index: {}]
  %s1 = inlined_call_operand.hbm [shape: bf16[128,128], index: 1, kind: input, shape index: {}]
  %s2 = inlined_call_operand.vmem [shape: f32[1,128], index: 2, kind: input, shape index: {}]
  %s3 = inlined_call_operand.vmem [shape: f32[1,128], index: 3, kind: input, shape index: {}]
  %s4 = inlined_call_operand.hbm [shape: bf16[128,128], index: 4, kind: input, shape index: {}]
  %s5 = inlined_call_operand.vmem [shape: f32[1,128], index: 5, kind: input, shape index: {}]
  %s6 = inlined_call_operand.hbm [shape: f32[16,128], index: 6, kind: output, shape index: {}]
  %s7 = sld [smem:[#allocation0]]
  $region46: #{tpu_custom_call.1} parent=0
    _
  %s9 = ssub.s32 1, %s7
  %s10 = scalar_select 0, %s9, %s7
  $region1: #{tpu_custom_call.1} parent=0
    #allocation2 [shape = 'u8[4096]{0}', space=vmem, size = 0x1000, scoped, tag = 'input window, operand 0, single buffered']
    #allocation3 [shape = 's32[1]{0}', space=sflag, size = 0x4, scoped, tag = 'scoped memory for tpu_custom_call.1']
    #allocation4 [shape = 's32[1]{0}', space=sflag, size = 0x4, scoped, tag = 'scoped memory for tpu_custom_call.1']
    #allocation5 [shape = 'u8[32768]{0}', space=vmem, size = 0x8000, scoped, tag = 'input window, operand 1, single buffered']
    #allocation6 [shape = 's32[1]{0}', space=sflag, size = 0x4, scoped, tag = 'scoped memory for tpu_custom_call.1']
    #allocation7 [shape = 'u8[32768]{0}', space=vmem, size = 0x8000, scoped, tag = 'input window, operand 4, single buffered']
    #allocation8 [shape = 'u8[8192]{0}', space=vmem, size = 0x2000, scoped, tag = 'output window, operand 0, single buffered']
    %11 = vsyncpa [#allocation3], 0
    %12 = vsyncpa [#allocation6], 0
    %13 = vsyncpa [#allocation4], 0
    // Predicated region
    $region2: #{tpu_custom_call.1} parent=1 // pred_check
      _
    $region3: #{tpu_custom_call.1} parent=1 // pred_check_branch
      %15 = sbr.rel (0) target = $region5
    $region4: #{tpu_custom_call.1} parent=1 // pred_region
      %s17 = ssub.s32 128, 128
      %18 = vsyncadd [#allocation3], %s17
      %s19 = sshll.u32 [#allocation2], 4
      %s20 = int_to_ptr.vmem [resolvable:$true] %s19
      %25 = dma.hbm_to_vmem [thread:$0]  %s0, 128, %s20, [#allocation3], 64, 64, 4
    $region5: #{tpu_custom_call.1} parent=1 // pred_fallthru
      _
    // Predicated region
    $region6: #{tpu_custom_call.1} parent=1 // pred_check
      _
    $region7: #{tpu_custom_call.1} parent=1 // pred_check_branch
      %27 = sbr.rel (0) target = $region9
    $region8: #{tpu_custom_call.1} parent=1 // pred_region
      %s29 = ssub.s32 1024, 1024
      %30 = vsyncadd [#allocation6], %s29
      %s31 = sshll.u32 [#allocation5], 4
      %s32 = int_to_ptr.vmem [resolvable:$true] %s31
      %37 = dma.hbm_to_vmem [thread:$0]  %s1, 1024, %s32, [#allocation6], 64, 64, 4
    $region9: #{tpu_custom_call.1} parent=1 // pred_fallthru
      _
    // Predicated region
    $region10: #{tpu_custom_call.1} parent=1 // pred_check
      _
    $region11: #{tpu_custom_call.1} parent=1 // pred_check_branch
      %39 = sbr.rel (0) target = $region13
    $region12: #{tpu_custom_call.1} parent=1 // pred_region
      _
    $region13: #{tpu_custom_call.1} parent=1 // pred_fallthru
      _
    // Predicated region
    $region14: #{tpu_custom_call.1} parent=1 // pred_check
      _
    $region15: #{tpu_custom_call.1} parent=1 // pred_check_branch
      %41 = sbr.rel (0) target = $region17
    $region16: #{tpu_custom_call.1} parent=1 // pred_region
      _
    $region17: #{tpu_custom_call.1} parent=1 // pred_fallthru
      _
    // Predicated region
    $region18: #{tpu_custom_call.1} parent=1 // pred_check
      _
    $region19: #{tpu_custom_call.1} parent=1 // pred_check_branch
      %43 = sbr.rel (0) target = $region21
    $region20: #{tpu_custom_call.1} parent=1 // pred_region
      %s45 = ssub.s32 1024, 1024
      %46 = vsyncadd [#allocation6], %s45
      %s47 = sshll.u32 [#allocation7], 4
      %s48 = int_to_ptr.vmem [resolvable:$true] %s47
      %53 = dma.hbm_to_vmem [thread:$0]  %s4, 1024, %s48, [#allocation6], 64, 64, 4
    $region21: #{tpu_custom_call.1} parent=1 // pred_fallthru
      _
    // Predicated region
    $region22: #{tpu_custom_call.1} parent=1 // pred_check
      _
    $region23: #{tpu_custom_call.1} parent=1 // pred_check_branch
      %55 = sbr.rel (0) target = $region25
    $region24: #{tpu_custom_call.1} parent=1 // pred_region
      _
    $region25: #{tpu_custom_call.1} parent=1 // pred_fallthru
      _
    // Predicated region
    $region26: #{tpu_custom_call.1} parent=1 // pred_check
      _
    $region27: #{tpu_custom_call.1} parent=1 // pred_check_branch
      %57 = sbr.rel (0) target = $region29
    $region28: #{tpu_custom_call.1} parent=1 // pred_region
      %58 = dma.done [#allocation3], 128
    $region29: #{tpu_custom_call.1} parent=1 // pred_fallthru
      _
    // Predicated region
    $region30: #{tpu_custom_call.1} parent=1 // pred_check
      _
    $region31: #{tpu_custom_call.1} parent=1 // pred_check_branch
      %60 = sbr.rel (0) target = $region33
    $region32: #{tpu_custom_call.1} parent=1 // pred_region
      %61 = dma.done [#allocation6], 1024
    $region33: #{tpu_custom_call.1} parent=1 // pred_fallthru
      _
    // Predicated region
    $region34: #{tpu_custom_call.1} parent=1 // pred_check
      _
    $region35: #{tpu_custom_call.1} parent=1 // pred_check_branch
      %63 = sbr.rel (0) target = $region37
    $region36: #{tpu_custom_call.1} parent=1 // pred_region
      %64 = dma.done [#allocation6], 1024
    $region37: #{tpu_custom_call.1} parent=1 // pred_fallthru
      _
    %v66 = vld [vmem:[#allocation2] sm:$0xf]
    %v67 = vld [vmem:[#allocation2 + $0x4] sm:$0xf]
    %v68 = vld [vmem:[#allocation5] sm:$0xf]
    %v69 = vld [vmem:[#allocation5 + $0x4] sm:$0xf]
    %v70 = vld [vmem:[#allocation5 + $0x8] sm:$0xf]
    %v71 = vld [vmem:[#allocation5 + $0xc] sm:$0xf]
    %v72 = vld [vmem:[#allocation5 + $0x10] sm:$0xf]
    %v73 = vld [vmem:[#allocation5 + $0x14] sm:$0xf]
    %v74 = vld [vmem:[#allocation5 + $0x18] sm:$0xf]
    %v75 = vld [vmem:[#allocation5 + $0x1c] sm:$0xf]
    %v76 = vld [vmem:[#allocation5 + $0x20] sm:$0xf]
    %v77 = vld [vmem:[#allocation5 + $0x24] sm:$0xf]
    %v78 = vld [vmem:[#allocation5 + $0x28] sm:$0xf]
    %v79 = vld [vmem:[#allocation5 + $0x2c] sm:$0xf]
    %v80 = vld [vmem:[#allocation5 + $0x30] sm:$0xf]
    %v81 = vld [vmem:[#allocation5 + $0x34] sm:$0xf]
    %v82 = vld [vmem:[#allocation5 + $0x38] sm:$0xf]
    %v83 = vld [vmem:[#allocation5 + $0x3c] sm:$0xf]
    %v86 = vunpack.c.l.b16 %v66
    %v87 = vunpack.c.l.b16 %v67
    %v88 = vpack.c.b16 %v87, %v86
    %v106 = vunpack.c.l.b16 %v68
    %v107 = vunpack.c.l.b16 %v69
    %v108 = vunpack.c.l.b16 %v70
    %v109 = vunpack.c.l.b16 %v71
    %v110 = vunpack.c.l.b16 %v72
    %v111 = vunpack.c.l.b16 %v73
    %v112 = vunpack.c.l.b16 %v74
    %v113 = vunpack.c.l.b16 %v75
    %v114 = vunpack.c.l.b16 %v76
    %v115 = vunpack.c.l.b16 %v77
    %v116 = vunpack.c.l.b16 %v78
    %v117 = vunpack.c.l.b16 %v79
    %v118 = vunpack.c.l.b16 %v80
    %v119 = vunpack.c.l.b16 %v81
    %v120 = vunpack.c.l.b16 %v82
    %v121 = vunpack.c.l.b16 %v83
    %v122 = vpack.c.b16 %v107, %v106
    %v123 = vpack.c.b16 %v109, %v108
    %v124 = vpack.c.b16 %v111, %v110
    %v125 = vpack.c.b16 %v113, %v112
    %v126 = vpack.c.b16 %v115, %v114
    %v127 = vpack.c.b16 %v117, %v116
    %v128 = vpack.c.b16 %v119, %v118
    %v129 = vpack.c.b16 %v121, %v120
    %138 = vmatprep.subr.bf16.mxu0 0
    %139 = vmatpush1.bf16.msra.mxu0 %v129
    %140 = vmatprep.subr.bf16.mxu0 0
    %141 = vmatpush1.bf16.msra.mxu0 %v128
    %142 = vmatprep.subr.bf16.mxu0 0
    %143 = vmatpush1.bf16.msra.mxu0 %v127
    %144 = vmatprep.subr.bf16.mxu0 0
    %145 = vmatpush1.bf16.msra.mxu0 %v126
    %146 = vmatprep.subr.bf16.mxu0 0
    %147 = vmatpush1.bf16.msra.mxu0 %v125
    %148 = vmatprep.subr.bf16.mxu0 0
    %149 = vmatpush1.bf16.msra.mxu0 %v124
    %150 = vmatprep.subr.bf16.mxu0 0
    %151 = vmatpush1.bf16.msra.mxu0 %v123
    %152 = vmatprep.subr.bf16.mxu0 0
    %153 = vmatpush1.bf16.msra.mxu0 %v122
    %154 = vmatprep.subr.bf16.mxu0 0
    %155 = vmatpush2.bf16.msra.mxu0 0
    %156 = vmatprep.subr.bf16.mxu0 0
    %157 = vmatpush2.bf16.msra.mxu0 0
    %158 = vmatprep.subr.bf16.mxu0 0
    %159 = vmatpush2.bf16.msra.mxu0 0
    %160 = vmatprep.subr.bf16.mxu0 0
    %161 = vmatpush2.bf16.msra.mxu0 0
    %162 = vmatprep.subr.bf16.mxu0 0
    %163 = vmatpush2.bf16.msra.mxu0 0
    %164 = vmatprep.subr.bf16.mxu0 0
    %165 = vmatpush2.bf16.msra.mxu0 0
    %166 = vmatprep.subr.bf16.mxu0 0
    %167 = vmatpush2.bf16.msra.mxu0 0
    %168 = vmatprep.subr.bf16.mxu0 0
    %169 = vmatpush2.bf16.msra.mxu0 0
    %170 = vmatprep.mubr.bf16.mxu0 0
    %171 = vmatmul.mubr.bf16.gmra.mxu0 %v88
    %v172 = vpop.f32.mrf.mxu0
    %v173 = vadd.f32 0.0, %v172
    %v174 = vpop.f32.mrf.mxu0
    %v175 = vpop.f32.mrf.mxu0
    %v176 = vadd.f32 0.0, %v175
    %v177 = vpop.f32.mrf.mxu0
    %178 = vdwg.mxu0
    %v179 = vld [vmem:[%s2] sm:$0x1]
    %v180 = vld [vmem:[%s3] sm:$0x1]
    %v181 = vld [vmem:[#allocation7] sm:$0xf]
    %v182 = vld [vmem:[#allocation7 + $0x4] sm:$0xf]
    %v183 = vld [vmem:[#allocation7 + $0x8] sm:$0xf]
    %v184 = vld [vmem:[#allocation7 + $0xc] sm:$0xf]
    %v185 = vld [vmem:[#allocation7 + $0x10] sm:$0xf]
    %v186 = vld [vmem:[#allocation7 + $0x14] sm:$0xf]
    %v187 = vld [vmem:[#allocation7 + $0x18] sm:$0xf]
    %v188 = vld [vmem:[#allocation7 + $0x1c] sm:$0xf]
    %v189 = vld [vmem:[#allocation7 + $0x20] sm:$0xf]
    %v190 = vld [vmem:[#allocation7 + $0x24] sm:$0xf]
    %v191 = vld [vmem:[#allocation7 + $0x28] sm:$0xf]
    %v192 = vld [vmem:[#allocation7 + $0x2c] sm:$0xf]
    %v193 = vld [vmem:[#allocation7 + $0x30] sm:$0xf]
    %v194 = vld [vmem:[#allocation7 + $0x34] sm:$0xf]
    %v195 = vld [vmem:[#allocation7 + $0x38] sm:$0xf]
    %v196 = vld [vmem:[#allocation7 + $0x3c] sm:$0xf]
    %v197 = vld [vmem:[%s5] sm:$0x1]
    %198 = vadd.xlane.f32.xlu0 %v173
    %v199 = vpop.xlane.xlu0 %198
    %200 = vadd.xlane.f32.xlu0 %v176
    %v201 = vpop.xlane.xlu0 %200
    %v202 = vmul.f32 %v173, %v173
    %v203 = vmul.f32 %v176, %v176
    %204 = vadd.xlane.f32.xlu0 %v202
    %v205 = vpop.xlane.xlu0 %204
    %206 = vadd.xlane.f32.xlu0 %v203
    %v207 = vpop.xlane.xlu0 %206
    %v208 = vmul.f32 %v199, 0.015625
    %v209 = vmul.f32 %v201, 0.015625
    %v210 = vmul.f32 %v205, 0.015625
    %v211 = vmul.f32 %v207, 0.015625
    %v212 = vmul.f32 %v208, %v208
    %v213 = vmul.f32 %v209, %v209
    %v214 = vsub.f32 %v210, %v212
    %v215 = vsub.f32 %v211, %v213
    %v216 = vmax.f32 %v214, 0.0
    %v217 = vmax.f32 %v215, 0.0
    %v218 = vsub.f32 %v173, %v208
    %v219 = vsub.f32 %v176, %v209
    %v220 = vadd.f32 %v216, 1e-05
    %v221 = vadd.f32 %v217, 1e-05
    %v222 = vrsqrt.pop %v220
    %v223 = vrsqrt.pop %v221
    %v224 = vmul.f32 %v218, %v222
    %v225 = vmul.f32 %v219, %v223
    %v227 = vlaneseq
    %v228 = vshrl.u32 %v227, 7
    %v229 = vsub.s32 0, %v228
    %v230 = vrot.slane %v179, %v229
    %v232 = vmul.f32 %v224, %v230
    %v233 = vmul.f32 %v225, %v230
    %v235 = vlaneseq
    %v236 = vshrl.u32 %v235, 7
    %v237 = vsub.s32 0, %v236
    %v238 = vrot.slane %v180, %v237
    %v240 = vadd.f32 %v232, %v238
    %v241 = vadd.f32 %v233, %v238
    %vm242 = vcmp.ge.f32.partialorder %v240, 0.0
    %vm243 = vcmp.ge.f32.partialorder %v241, 0.0
    %v244 = vmul.f32 %v240, 0.01
    %v245 = vmul.f32 %v241, 0.01
    %v246 = vsel %vm242, %v240, %v244
    %v247 = vsel %vm243, %v241, %v245
    %v248 = vpack.c.bf16 %v247, %v246
    %v250 = vlaneseq
    %v251 = vshrl.u32 %v250, 7
    %v252 = vsub.s32 0, %v251
    %v253 = vrot.slane %v197, %v252
    %v271 = vunpack.c.l.b16 %v181
    %v272 = vunpack.c.l.b16 %v182
    %v273 = vunpack.c.l.b16 %v183
    %v274 = vunpack.c.l.b16 %v184
    %v275 = vunpack.c.l.b16 %v185
    %v276 = vunpack.c.l.b16 %v186
    %v277 = vunpack.c.l.b16 %v187
    %v278 = vunpack.c.l.b16 %v188
    %v279 = vunpack.c.l.b16 %v189
    %v280 = vunpack.c.l.b16 %v190
    %v281 = vunpack.c.l.b16 %v191
    %v282 = vunpack.c.l.b16 %v192
    %v283 = vunpack.c.l.b16 %v193
    %v284 = vunpack.c.l.b16 %v194
    %v285 = vunpack.c.l.b16 %v195
    %v286 = vunpack.c.l.b16 %v196
    %v287 = vpack.c.b16 %v272, %v271
    %v288 = vpack.c.b16 %v274, %v273
    %v289 = vpack.c.b16 %v276, %v275
    %v290 = vpack.c.b16 %v278, %v277
    %v291 = vpack.c.b16 %v280, %v279
    %v292 = vpack.c.b16 %v282, %v281
    %v293 = vpack.c.b16 %v284, %v283
    %v294 = vpack.c.b16 %v286, %v285
    %303 = vmatprep.subr.bf16.mxu0 0
    %304 = vmatpush1.bf16.msra.mxu0 %v294
    %305 = vmatprep.subr.bf16.mxu0 0
    %306 = vmatpush1.bf16.msra.mxu0 %v293
    %307 = vmatprep.subr.bf16.mxu0 0
    %308 = vmatpush1.bf16.msra.mxu0 %v292
    %309 = vmatprep.subr.bf16.mxu0 0
    %310 = vmatpush1.bf16.msra.mxu0 %v291
    %311 = vmatprep.subr.bf16.mxu0 0
    %312 = vmatpush1.bf16.msra.mxu0 %v290
    %313 = vmatprep.subr.bf16.mxu0 0
    %314 = vmatpush1.bf16.msra.mxu0 %v289
    %315 = vmatprep.subr.bf16.mxu0 0
    %316 = vmatpush1.bf16.msra.mxu0 %v288
    %317 = vmatprep.subr.bf16.mxu0 0
    %318 = vmatpush1.bf16.msra.mxu0 %v287
    %319 = vmatprep.subr.bf16.mxu0 0
    %320 = vmatpush2.bf16.msra.mxu0 0
    %321 = vmatprep.subr.bf16.mxu0 0
    %322 = vmatpush2.bf16.msra.mxu0 0
    %323 = vmatprep.subr.bf16.mxu0 0
    %324 = vmatpush2.bf16.msra.mxu0 0
    %325 = vmatprep.subr.bf16.mxu0 0
    %326 = vmatpush2.bf16.msra.mxu0 0
    %327 = vmatprep.subr.bf16.mxu0 0
    %328 = vmatpush2.bf16.msra.mxu0 0
    %329 = vmatprep.subr.bf16.mxu0 0
    %330 = vmatpush2.bf16.msra.mxu0 0
    %331 = vmatprep.subr.bf16.mxu0 0
    %332 = vmatpush2.bf16.msra.mxu0 0
    %333 = vmatprep.subr.bf16.mxu0 0
    %334 = vmatpush2.bf16.msra.mxu0 0
    %335 = vmatprep.mubr.bf16.mxu0 0
    %336 = vmatmul.mubr.bf16.gmra.mxu0 %v248
    %v337 = vpop.f32.mrf.mxu0
    %v338 = vadd.f32 %v253, %v337
    %v339 = vpop.f32.mrf.mxu0
    %v340 = vpop.f32.mrf.mxu0
    %v341 = vadd.f32 %v253, %v340
    %v342 = vpop.f32.mrf.mxu0
    %343 = vdwg.mxu0
    %344 = vst [vmem:[#allocation8] sm:$0xff] %v338
    %345 = vst [vmem:[#allocation8 + $0x8] sm:$0xff] %v341
    // Predicated region
    $region38: #{tpu_custom_call.1} parent=1 // pred_check
      _
    $region39: #{tpu_custom_call.1} parent=1 // pred_check_branch
      %347 = sbr.rel (0) target = $region41
    $region40: #{tpu_custom_call.1} parent=1 // pred_region
      %s349 = ssub.s32 256, 256
      %350 = vsyncadd [#allocation4], %s349
      %s351 = sshll.u32 [#allocation8], 4
      %s352 = int_to_ptr.vmem [resolvable:$true] %s351
      %357 = dma.vmem_to_hbm [thread:$0]  %s352, 256, %s6, [#allocation4], 128, 128, 8
    $region41: #{tpu_custom_call.1} parent=1 // pred_fallthru
      _
    // Predicated region
    $region42: #{tpu_custom_call.1} parent=1 // pred_check
      _
    $region43: #{tpu_custom_call.1} parent=1 // pred_check_branch
      %359 = sbr.rel (0) target = $region45
    $region44: #{tpu_custom_call.1} parent=1 // pred_region
      %360 = dma.done [#allocation4], 256
    $region45: #{tpu_custom_call.1} parent=1 // pred_fallthru
      _
    %361 = vsyncpa [#allocation3], 1
    %362 = vsyncpa [#allocation6], 1
    %363 = vsyncpa [#allocation4], 1

</llo_original>
